<compile_context>
chip_gen: v7x
topology: tpu7x:2x2x1
jax: 0.10.0
libtpu: 0.0.40
codegen_flags: <defaults>
</compile_context>

<pallas_src>
import functools

import jax
import jax.numpy as jnp
from jax import lax
from jax.experimental import pallas as pl
from jax.experimental.pallas import tpu as pltpu

ALPHA = 0.25
GAMMA = 2.0
LANE = 128
MAX_TILE_ROWS = 8192          # (8192, 128) f32 = 4 MiB per input tile
SUB_ROWS = 512                # compute sub-slab rows (bounds live vregs/scratch)
VMEM_LIMIT_BYTES = 48 * 1024 * 1024


def _round_up(x, m):
    return ((x + m - 1) // m) * m


def _num_tensorcores():
    """Best-effort TensorCores-per-chip (1 on v5e/v6e, 2 on v7x)."""
    try:
        info = pltpu.get_tpu_info()
    except Exception:
        return 1
    for name in ("num_tensorcores", "tensorcore_count", "tensorcores_per_chip"):
        v = getattr(info, name, None)
        if v:
            try:
                return max(1, int(v))
            except (TypeError, ValueError):
                pass
    return 1


def _focal_elementwise(x, tgt, alpha, gamma):
    """Numerically stable focal loss, f32 in-vreg.

    One shared exp(-|x|) drives both the BCE-with-logits and the sigmoid;
    gamma == 2 uses w*w instead of the pow -> exp(log) path.
    """
    e = jnp.exp(-jnp.abs(x))
    bce = jnp.maximum(x, 0.0) - x * tgt + jnp.log1p(e)
    # NOTE: pl.reciprocal(1.0 + e, approx=True) would move this divide to the
    # EUP slot; kept exact to preserve the tight match with the reference
    # (review: negligible while the kernel is HBM-bandwidth-bound).
    inv = 1.0 / (1.0 + e)
    probs = jnp.where(x >= 0.0, inv, e * inv)
    pt = jnp.where(tgt == 1.0, probs, 1.0 - probs)
    w = 1.0 - pt
    mod = w * w if gamma == 2.0 else w ** gamma
    return alpha * mod * bce


def _focal_loss_kernel(x_ref, t_ref, o_ref, *, alpha, gamma, tile_rows,
                       sub_rows, tiles_per_chunk, full_rows, tail_lanes,
                       needs_mask, single_tile):
    c = pl.program_id(0)   # parallel chunk
    t = pl.program_id(1)   # sequential tile inside the chunk (reduction axis)

    @pl.when(t == 0)
    def _():
        o_ref[...] = jnp.zeros_like(o_ref)

    num_subs = tile_rows // sub_rows

    def accumulate(masked, tile_row0):
        if masked:
            # iotas hoisted out of the sub-slab loop (broadcasts are not CSE'd)
            row_ids = lax.broadcasted_iota(jnp.int32, (sub_rows, LANE), 0)
            lane_ids = lax.broadcasted_iota(jnp.int32, (sub_rows, LANE), 1)

        def body(s, carry):
            r0 = pl.multiple_of(s * sub_rows, sub_rows)
            x = x_ref[pl.ds(r0, sub_rows), :].astype(jnp.float32)
            tgt = t_ref[pl.ds(r0, sub_rows), :].astype(jnp.float32)
            focal = _focal_elementwise(x, tgt, alpha, gamma)
            if masked:
                grow = row_ids + (tile_row0 + r0)       # global row index (i32)
                keep = (grow < full_rows) | ((grow == full_rows)
                                             & (lane_ids < tail_lanes))
                # select (not multiply): overhang rows may hold garbage / NaN.
                focal = jnp.where(keep, focal, 0.0)
            # VPU-only partial reduce into the resident (8, 128) output block.
            o_ref[...] += jnp.sum(focal.reshape(sub_rows // 8, 8, LANE), axis=0)
            return carry

        lax.fori_loop(0, num_subs, body, 0)

    if not needs_mask:
        accumulate(masked=False, tile_row0=None)
    elif single_tile:
        accumulate(masked=True, tile_row0=0)
    else:
        g = c * tiles_per_chunk + t           # logical (unclamped) tile index
        tile_row0 = g * tile_rows
        overhangs = tile_row0 + tile_rows > full_rows

        @pl.when(jnp.logical_not(overhangs))
        def _():
            accumulate(masked=False, tile_row0=None)

        @pl.when(overhangs)
        def _():
            accumulate(masked=True, tile_row0=tile_row0)


def focal_loss(inputs, targets, alpha=ALPHA, gamma=GAMMA, reduction="mean"):
    """Binary focal loss with logits, matching the PyTorch module's forward.

    Callers may pass bf16 logits / targets (binary targets are exactly
    representable); the kernel upcasts in-vreg, so narrower inputs directly
    cut HBM traffic for this bandwidth-bound kernel.
    """
    assert inputs.shape == targets.shape
    if reduction not in ("mean", "sum"):
        # TODO(synk): reduction='none' (full per-element output) is not
        # implemented in the Pallas path.
        raise NotImplementedError("reduction='none' not supported by the Pallas kernel")

    n_elems = inputs.size
    flat_x = inputs.reshape(-1)            # free reshape (metadata only)
    flat_t = targets.reshape(-1)

    full_rows, tail_lanes = divmod(n_elems, LANE)
    rows_arr = full_rows + (1 if tail_lanes else 0)

    if tail_lanes:
        # Residual copy: only when n is not a multiple of 128 (rare for NN
        # tensors). Pads by <128 elements so the (rows, 128) reshape is legal;
        # the padded zeros are masked out inside the kernel.
        # TODO(synk): a fully copy-free ragged tail would need 1-D blocks or a
        # manual-DMA (memory_space=pl.ANY) path.
        pad = rows_arr * LANE - n_elems
        flat_x = jnp.pad(flat_x, (0, pad))
        flat_t = jnp.pad(flat_t, (0, pad))

    x2 = flat_x.reshape(rows_arr, LANE)
    t2 = flat_t.reshape(rows_arr, LANE)

    # Tile selection: as large as possible (low per-grid-step overhead), a
    # multiple of the compute sub-slab; the ragged overhang is masked in-kernel.
    if rows_arr >= MAX_TILE_ROWS:
        tile_rows, sub_rows = MAX_TILE_ROWS, SUB_ROWS
    elif rows_arr > SUB_ROWS:
        tile_rows, sub_rows = _round_up(rows_arr, SUB_ROWS), SUB_ROWS
    else:
        tile_rows = _round_up(rows_arr, 8)
        sub_rows = tile_rows

    total_tiles = pl.cdiv(rows_arr, tile_rows)
    num_chunks = max(1, min(_num_tensorcores(), 2, total_tiles))
    tiles_per_chunk = pl.cdiv(total_tiles, num_chunks)
    grid_tiles = num_chunks * tiles_per_chunk

    needs_mask = grid_tiles * tile_rows > full_rows
    single_tile = grid_tiles == 1

    if grid_tiles > total_tiles:
        # Trailing grid steps that map past the last block: clamp their DMA to
        # the last valid block; their contribution is masked to zero in-kernel
        # (the mask uses the unclamped logical tile index).
        def in_map(c, t):
            return (jnp.minimum(c * tiles_per_chunk + t, total_tiles - 1), 0)
    else:
        def in_map(c, t):
            return (c * tiles_per_chunk + t, 0)

    kernel = functools.partial(
        _focal_loss_kernel, alpha=alpha, gamma=gamma, tile_rows=tile_rows,
        sub_rows=sub_rows, tiles_per_chunk=tiles_per_chunk,
        full_rows=full_rows, tail_lanes=tail_lanes,
        needs_mask=needs_mask, single_tile=single_tile)

    partials = pl.pallas_call(
        kernel,
        out_shape=jax.ShapeDtypeStruct((num_chunks, 8, LANE), jnp.float32),
        grid_spec=pltpu.PrefetchScalarGridSpec(
            num_scalar_prefetch=0,
            grid=(num_chunks, tiles_per_chunk),
            in_specs=[
                pl.BlockSpec((tile_rows, LANE), in_map),
                pl.BlockSpec((tile_rows, LANE), in_map),
            ],
            out_specs=pl.BlockSpec((None, 8, LANE), lambda c, t: (c, 0, 0)),
        ),
        compiler_params=pltpu.CompilerParams(
            # TODO(synk): on v7x, try pltpu.CORE_PARALLEL on axis 0 (and confirm
            # both TCs run in the xprof trace); plain "parallel" is a no-op on
            # single-TC v5e/v6e.
            dimension_semantics=("parallel", "arbitrary"),
            vmem_limit_bytes=VMEM_LIMIT_BYTES),
    )(x2, t2)

    total = jnp.sum(partials)   # tiny (num_chunks, 8, 128) finalize
    if reduction == "mean":
        return total / jnp.float32(n_elems)
    return total


def focal_loss_ref(inputs, targets, alpha=ALPHA, gamma=GAMMA):
    x = inputs.astype(jnp.float32)
    t = targets.astype(jnp.float32)
    bce = jnp.maximum(x, 0.0) - x * t + jnp.log1p(jnp.exp(-jnp.abs(x)))
    p = jax.nn.sigmoid(x)
    pt = jnp.where(t == 1.0, p, 1.0 - p)
    return jnp.mean(alpha * (1.0 - pt) ** gamma * bce)


if __name__ == "__main__":
    key = jax.random.PRNGKey(0)
    k1, k2, k3, k4 = jax.random.split(key, 4)

    # Primary check: NCHW logits + binary targets (n % 128 == 0 -> zero-copy path).
    x = jax.random.normal(k1, (2, 4, 16, 16), dtype=jnp.float32)
    tgt = (jax.random.uniform(k2, (2, 4, 16, 16)) > 0.5).astype(jnp.float32)
    loss = focal_loss(x, tgt)
    jax.block_until_ready(loss)
    ref = focal_loss_ref(x, tgt)
    assert jnp.allclose(loss, ref, rtol=1e-5, atol=1e-6), (loss, ref)

    # Ragged-tail check (n % 128 != 0 -> boundary-row lane-mask path).
    xr = jax.random.normal(k3, (3, 5, 7, 11), dtype=jnp.float32) * 3.0
    tr = (jax.random.uniform(k4, (3, 5, 7, 11)) > 0.5).astype(jnp.float32)
    loss_r = focal_loss(xr, tr)
    ref_r = focal_loss_ref(xr, tr)
    assert jnp.allclose(loss_r, ref_r, rtol=1e-5, atol=1e-6), (loss_r, ref_r)

    # Multi-sub-slab + ragged-row check (rows not a multiple of the tile).
    k5, k6 = jax.random.split(k1)
    xm = jax.random.normal(k5, (8, 200, 128), dtype=jnp.float32)
    tm = (jax.random.uniform(k6, (8, 200, 128)) > 0.5).astype(jnp.float32)
    loss_m = focal_loss(xm, tm)
    ref_m = focal_loss_ref(xm, tm)
    # Slightly looser rtol: f32 summation-order difference over ~2e5 terms.
    assert jnp.allclose(loss_m, ref_m, rtol=2e-5, atol=1e-6), (loss_m, ref_m)

    jax.block_until_ready((loss, loss_r, loss_m))
    print("KERNEL_OK")
</pallas_src>

<mosaic_0001>
module attributes {stable_mosaic.version = 11 : i64} {
  func.func @_focal_loss_kernel(%arg0: i32, %arg1: i32, %arg2: memref<16x128xf32, #tpu.memory_space<vmem>>, %arg3: memref<16x128xf32, #tpu.memory_space<vmem>>, %arg4: memref<1x8x128xf32, #tpu.memory_space<vmem>>) attributes {dimension_semantics = [#tpu.dimension_semantics<parallel>, #tpu.dimension_semantics<arbitrary>], iteration_bounds = array<i64: 1, 1>, scalar_prefetch = 0 : i64, scratch_operands = 0 : i64, tpu.core_type = #tpu.core_type<tc>, window_params = [{transform_indices = @transform_0, window_bounds = array<i64: 16, 128>}, {transform_indices = @transform_1, window_bounds = array<i64: 16, 128>}, {transform_indices = @transform_2, window_bounds = array<i64: 1, 8, 128>}]} {
    %c0_i32 = arith.constant 0 : i32
    %0 = arith.cmpi eq, %arg1, %c0_i32 : i32
    %1 = arith.extui %0 : i1 to i32
    %c0_i32_0 = arith.constant 0 : i32
    %2 = arith.cmpi ne, %1, %c0_i32_0 : i32
    scf.if %2 {
      %cst_18 = arith.constant 0.000000e+00 : f32
      %46 = vector.broadcast %cst_18 : f32 to vector<8x128xf32>
      %c0_19 = arith.constant 0 : index
      %c0_20 = arith.constant 0 : index
      %c0_21 = arith.constant 0 : index
      %47 = vector.load %arg4[%c0_19, %c0_20, %c0_21] : memref<1x8x128xf32, #tpu.memory_space<vmem>>, vector<1x8x128xf32>
      %48 = vector.shape_cast %47 : vector<1x8x128xf32> to vector<8x128xf32>
      %49 = vector.shape_cast %46 : vector<8x128xf32> to vector<1x8x128xf32>
      tpu.vector_store %arg4[%c0_19, %c0_20, %c0_21], %49 {strides = array<i32>} : memref<1x8x128xf32, #tpu.memory_space<vmem>>, vector<1x8x128xf32>,
    } else {
    }
    %c0_i32_1 = arith.constant 0 : i32
    %c16_i32 = arith.constant 16 : i32
    %3 = arith.muli %c0_i32_1, %c16_i32 : i32
    %4 = tpu.assume_multiple %3, 16 : i32
    %5 = arith.index_cast %4 : i32 to index
    %c0 = arith.constant 0 : index
    %6 = vector.load %arg2[%5, %c0] : memref<16x128xf32, #tpu.memory_space<vmem>>, vector<16x128xf32>
    %7 = arith.index_cast %4 : i32 to index
    %c0_2 = arith.constant 0 : index
    %8 = vector.load %arg3[%7, %c0_2] : memref<16x128xf32, #tpu.memory_space<vmem>>, vector<16x128xf32>
    %9 = math.absf %6 : vector<16x128xf32>
    %cst = arith.constant 0.000000e+00 : f32
    %10 = vector.broadcast %cst : f32 to vector<16x128xf32>
    %11 = arith.subf %10, %9 : vector<16x128xf32>
    %12 = math.exp %11 : vector<16x128xf32>
    %cst_3 = arith.constant 0.000000e+00 : f32
    %13 = vector.broadcast %cst_3 : f32 to vector<16x128xf32>
    %14 = arith.maximumf %6, %13 : vector<16x128xf32>
    %15 = arith.mulf %6, %8 : vector<16x128xf32>
    %16 = arith.subf %14, %15 : vector<16x128xf32>
    %17 = math.log1p %12 : vector<16x128xf32>
    %18 = arith.addf %16, %17 : vector<16x128xf32>
    %cst_4 = arith.constant 1.000000e+00 : f32
    %19 = vector.broadcast %cst_4 : f32 to vector<16x128xf32>
    %20 = arith.addf %19, %12 : vector<16x128xf32>
    %cst_5 = arith.constant 1.000000e+00 : f32
    %21 = vector.broadcast %cst_5 : f32 to vector<16x128xf32>
    %22 = arith.divf %21, %20 : vector<16x128xf32>
    %cst_6 = arith.constant 0.000000e+00 : f32
    %23 = vector.broadcast %cst_6 : f32 to vector<16x128xf32>
    %24 = arith.cmpf oge, %6, %23 : vector<16x128xf32>
    %25 = arith.mulf %12, %22 : vector<16x128xf32>
    %26 = arith.select %24, %22, %25 : vector<16x128xi1>, vector<16x128xf32>
    %cst_7 = arith.constant 1.000000e+00 : f32
    %27 = vector.broadcast %cst_7 : f32 to vector<16x128xf32>
    %28 = arith.cmpf oeq, %8, %27 : vector<16x128xf32>
    %cst_8 = arith.constant 1.000000e+00 : f32
    %29 = vector.broadcast %cst_8 : f32 to vector<16x128xf32>
    %30 = arith.subf %29, %26 : vector<16x128xf32>
    %31 = arith.select %28, %26, %30 : vector<16x128xi1>, vector<16x128xf32>
    %cst_9 = arith.constant 1.000000e+00 : f32
    %32 = vector.broadcast %cst_9 : f32 to vector<16x128xf32>
    %33 = arith.subf %32, %31 : vector<16x128xf32>
    %34 = arith.mulf %33, %33 : vector<16x128xf32>
    %cst_10 = arith.constant 2.500000e-01 : f32
    %35 = vector.broadcast %cst_10 : f32 to vector<16x128xf32>
    %36 = arith.mulf %35, %34 : vector<16x128xf32>
    %37 = arith.mulf %36, %18 : vector<16x128xf32>
    %c0_11 = arith.constant 0 : index
    %c0_12 = arith.constant 0 : index
    %c0_13 = arith.constant 0 : index
    %38 = vector.load %arg4[%c0_11, %c0_12, %c0_13] : memref<1x8x128xf32, #tpu.memory_space<vmem>>, vector<1x8x128xf32>
    %39 = vector.shape_cast %38 : vector<1x8x128xf32> to vector<8x128xf32>
    %40 = vector.shape_cast %37 : vector<16x128xf32> to vector<2x8x128xf32>
    %cst_14 = arith.constant dense<0.000000e+00> : vector<8x128xf32>
    %41 = vector.multi_reduction <add>, %40, %cst_14 [0] : vector<2x8x128xf32> to vector<8x128xf32>
    %42 = arith.addf %39, %41 : vector<8x128xf32>
    %c0_15 = arith.constant 0 : index
    %c0_16 = arith.constant 0 : index
    %c0_17 = arith.constant 0 : index
    %43 = vector.load %arg4[%c0_15, %c0_16, %c0_17] : memref<1x8x128xf32, #tpu.memory_space<vmem>>, vector<1x8x128xf32>
    %44 = vector.shape_cast %43 : vector<1x8x128xf32> to vector<8x128xf32>
    %45 = vector.shape_cast %42 : vector<8x128xf32> to vector<1x8x128xf32>
    tpu.vector_store %arg4[%c0_15, %c0_16, %c0_17], %45 {strides = array<i32>} : memref<1x8x128xf32, #tpu.memory_space<vmem>>, vector<1x8x128xf32>,
    %c1_i32 = arith.constant 1 : i32
    return
  }
  func.func @transform_0(%arg0: i32, %arg1: i32) -> (i32, i32) {
    %c1_i32 = arith.constant 1 : i32
    %0 = arith.muli %arg0, %c1_i32 : i32
    %1 = arith.addi %0, %arg1 : i32
    %c0_i32 = arith.constant 0 : i32
    %c0_i32_0 = arith.constant 0 : i32
    return %1, %c0_i32 : i32, i32
  }
  func.func @transform_1(%arg0: i32, %arg1: i32) -> (i32, i32) {
    %c1_i32 = arith.constant 1 : i32
    %0 = arith.muli %arg0, %c1_i32 : i32
    %1 = arith.addi %0, %arg1 : i32
    %c0_i32 = arith.constant 0 : i32
    %c0_i32_0 = arith.constant 0 : i32
    return %1, %c0_i32 : i32, i32
  }
  func.func @transform_2(%arg0: i32, %arg1: i32) -> (i32, i32, i32) {
    %c0_i32 = arith.constant 0 : i32
    %c0_i32_0 = arith.constant 0 : i32
    %c0_i32_1 = arith.constant 0 : i32
    return %arg0, %c0_i32, %c0_i32_0 : i32, i32, i32
  }
}

</mosaic_0001>

<llo_original>
// kernel: tpu_custom_call.1
$region0: #{tpu_custom_call.1}
  #allocation0 [shape = 'u32[]', space=smem, size = 0x4, offset = 0x4, fixed_abs, tag = 'smem constant byte address 0x4 - core index']
  #allocation1 [shape = 'u32[144,128]{1,0:T(1,128)}', space=vmem, size = 0x12000, scoped, tag = 'internal scratch']
  %s0 = inlined_call_operand.hbm [shape: f32[16,128], index: 0, kind: input, shape index: {}]
  %s1 = inlined_call_operand.hbm [shape: f32[16,128], index: 1, kind: input, shape index: {}]
  %s2 = inlined_call_operand.hbm [shape: f32[1,8,128], index: 2, kind: output, shape index: {}]
  %s3 = sld [smem:[#allocation0]]
  $region30: #{tpu_custom_call.1} parent=0
    _
  %s5 = ssub.s32 1, %s3
  %s6 = scalar_select 0, %s5, %s3
  $region1: #{tpu_custom_call.1} parent=0
    #allocation2 [shape = 'u8[8192]{0}', space=vmem, size = 0x2000, scoped, tag = 'input window, operand 0, single buffered']
    #allocation3 [shape = 's32[1]{0}', space=sflag, size = 0x4, scoped, tag = 'scoped memory for tpu_custom_call.1']
    #allocation4 [shape = 's32[1]{0}', space=sflag, size = 0x4, scoped, tag = 'scoped memory for tpu_custom_call.1']
    #allocation5 [shape = 'u8[8192]{0}', space=vmem, size = 0x2000, scoped, tag = 'input window, operand 1, single buffered']
    #allocation6 [shape = 's32[1]{0}', space=sflag, size = 0x4, scoped, tag = 'scoped memory for tpu_custom_call.1']
    #allocation7 [shape = 'u8[4096]{0}', space=vmem, size = 0x1000, scoped, tag = 'output window, operand 0, single buffered']
    %7 = vsyncpa [#allocation3], 0
    %8 = vsyncpa [#allocation6], 0
    %9 = vsyncpa [#allocation4], 0
    // Predicated region
    $region2: #{tpu_custom_call.1} parent=1 // pred_check
      _
    $region3: #{tpu_custom_call.1} parent=1 // pred_check_branch
      %11 = sbr.rel (0) target = $region5
    $region4: #{tpu_custom_call.1} parent=1 // pred_region
      %s12 = sadd.s32 0, 0
      %s13 = smul.u32 2, %s12
      %s15 = ssub.s32 256, 256
      %16 = vsyncadd [#allocation3], %s15
      %s17 = smul.addr %s13, 128
      %s18 = scalar_lea.hbm %s0, %s17
      %s19 = sshll.u32 [#allocation2], 4
      %s20 = int_to_ptr.vmem [resolvable:$true] %s19
      %25 = dma.hbm_to_vmem [thread:$0]  %s18, 256, %s20, [#allocation3], 128, 128, 8
    $region5: #{tpu_custom_call.1} parent=1 // pred_fallthru
      _
    // Predicated region
    $region6: #{tpu_custom_call.1} parent=1 // pred_check
      _
    $region7: #{tpu_custom_call.1} parent=1 // pred_check_branch
      %27 = sbr.rel (0) target = $region9
    $region8: #{tpu_custom_call.1} parent=1 // pred_region
      %s28 = sadd.s32 0, 0
      %s29 = smul.u32 2, %s28
      %s31 = ssub.s32 256, 256
      %32 = vsyncadd [#allocation6], %s31
      %s33 = smul.addr %s29, 128
      %s34 = scalar_lea.hbm %s1, %s33
      %s35 = sshll.u32 [#allocation5], 4
      %s36 = int_to_ptr.vmem [resolvable:$true] %s35
      %41 = dma.hbm_to_vmem [thread:$0]  %s34, 256, %s36, [#allocation6], 128, 128, 8
    $region9: #{tpu_custom_call.1} parent=1 // pred_fallthru
      _
    // Predicated region
    $region10: #{tpu_custom_call.1} parent=1 // pred_check
      _
    $region11: #{tpu_custom_call.1} parent=1 // pred_check_branch
      %43 = sbr.rel (0) target = $region13
    $region12: #{tpu_custom_call.1} parent=1 // pred_region
      %44 = dma.done [#allocation3], 256
    $region13: #{tpu_custom_call.1} parent=1 // pred_fallthru
      _
    // Predicated region
    $region14: #{tpu_custom_call.1} parent=1 // pred_check
      _
    $region15: #{tpu_custom_call.1} parent=1 // pred_check_branch
      %46 = sbr.rel (0) target = $region17
    $region16: #{tpu_custom_call.1} parent=1 // pred_region
      %47 = dma.done [#allocation6], 256
    $region17: #{tpu_custom_call.1} parent=1 // pred_fallthru
      _
    %s48 = sadd.s32 0, 0
    %s49 = smul.u32 2, %s48
    %s50 = sadd.s32 0, 0
    %s51 = smul.u32 2, %s50
    %p52 = scmp.eq.s32.totalorder 0, 0
    // Predicated region
    $region18: #{tpu_custom_call.1} parent=1 // pred_check
      %p53 = pneg %p52
    $region19: #{tpu_custom_call.1} parent=1 // pred_check_branch
      %55 = sbr.rel (%p53) target = $region21
    $region20: #{tpu_custom_call.1} parent=1 // pred_region
      %56 = vst [vmem:[#allocation7] sm:$0xff] 0.0
    $region21: #{tpu_custom_call.1} parent=1 // pred_fallthru
      _
    %v57 = vld [vmem:[#allocation2] sm:$0xff]
    %v58 = vld [vmem:[#allocation2 + $0x8] sm:$0xff]
    %v59 = vld [vmem:[#allocation5] sm:$0xff]
    %v60 = vld [vmem:[#allocation5 + $0x8] sm:$0xff]
    %v61 = vand.u32 2147483647, %v57
    %v62 = vand.u32 2147483647, %v58
    %v63 = vsub.f32 0.0, %v61
    %v64 = vsub.f32 0.0, %v62
    %v65 = vmul.f32 %v63, 1.442695
    %v66 = vpow.pop %v65
    %v67 = vmul.f32 %v64, 1.442695
    %v68 = vpow.pop %v67
    %v69 = vmax.f32 %v57, 0.0
    %v70 = vmax.f32 %v58, 0.0
    %v71 = vmul.f32 %v57, %v59
    %v72 = vmul.f32 %v58, %v60
    %v73 = vsub.f32 %v69, %v71
    %v74 = vsub.f32 %v70, %v72
    %v75 = vadd.f32 %v66, 1.0
    %v76 = vlog2.pop %v75
    %v77 = vmul.f32 %v76, 0.6931472
    %v78 = vmul.f32 -0.5, %v66
    %v79 = vadd.f32 %v78, 1.0
    %v80 = vmul.f32 %v79, %v66
    %v81 = vand.u32 2147483647, %v66
    %vm82 = vcmp.lt.f32.partialorder %v81, 0.0004427343
    %v83 = vsel %vm82, %v80, %v77
    %v84 = vadd.f32 %v68, 1.0
    %v85 = vlog2.pop %v84
    %v86 = vmul.f32 %v85, 0.6931472
    %v87 = vmul.f32 -0.5, %v68
    %v88 = vadd.f32 %v87, 1.0
    %v89 = vmul.f32 %v88, %v68
    %v90 = vand.u32 2147483647, %v68
    %vm91 = vcmp.lt.f32.partialorder %v90, 0.0004427343
    %v92 = vsel %vm91, %v89, %v86
    %v93 = vadd.f32 %v73, %v83
    %v94 = vadd.f32 %v74, %v92
    %v95 = vadd.f32 %v66, 1.0
    %v96 = vadd.f32 %v68, 1.0
    %v97 = vrcp.pop %v95
    %v98 = vmul.f32 1.0, %v97
    %v99 = vrcp.pop %v96
    %v100 = vmul.f32 1.0, %v99
    %vm101 = vcmp.ge.f32.partialorder %v57, 0.0
    %vm102 = vcmp.ge.f32.partialorder %v58, 0.0
    %v103 = vmul.f32 %v66, %v98
    %v104 = vmul.f32 %v68, %v100
    %v105 = vsel %vm101, %v98, %v103
    %v106 = vsel %vm102, %v100, %v104
    %vm107 = vcmp.eq.f32.partialorder %v59, 1.0
    %vm108 = vcmp.eq.f32.partialorder %v60, 1.0
    %v109 = vsub.f32 1.0, %v105
    %v110 = vsub.f32 1.0, %v106
    %v111 = vsel %vm107, %v105, %v109
    %v112 = vsel %vm108, %v106, %v110
    %v113 = vsub.f32 1.0, %v111
    %v114 = vsub.f32 1.0, %v112
    %v115 = vmul.f32 %v113, %v113
    %v116 = vmul.f32 %v114, %v114
    %v117 = vmul.f32 %v115, 0.25
    %v118 = vmul.f32 %v116, 0.25
    %v119 = vmul.f32 %v117, %v93
    %v120 = vmul.f32 %v118, %v94
    %v121 = vld [vmem:[#allocation7] sm:$0xff]
    %v122 = vadd.f32 %v119, %v120
    %v123 = vadd.f32 %v121, %v122
    %124 = vst [vmem:[#allocation7] sm:$0xff] %v123
    // Predicated region
    $region22: #{tpu_custom_call.1} parent=1 // pred_check
      _
    $region23: #{tpu_custom_call.1} parent=1 // pred_check_branch
      %126 = sbr.rel (0) target = $region25
    $region24: #{tpu_custom_call.1} parent=1 // pred_region
      %s128 = ssub.s32 128, 128
      %129 = vsyncadd [#allocation4], %s128
      %s131 = sshll.u32 [#allocation7], 4
      %s132 = int_to_ptr.vmem [resolvable:$true] %s131
      %134 = dma.vmem_to_hbm [thread:$0]  %s132, 128, %s2, [#allocation4]
    $region25: #{tpu_custom_call.1} parent=1 // pred_fallthru
      _
    // Predicated region
    $region26: #{tpu_custom_call.1} parent=1 // pred_check
      _
    $region27: #{tpu_custom_call.1} parent=1 // pred_check_branch
      %136 = sbr.rel (0) target = $region29
    $region28: #{tpu_custom_call.1} parent=1 // pred_region
      %137 = dma.done [#allocation4], 128
    $region29: #{tpu_custom_call.1} parent=1 // pred_fallthru
      _
    %138 = vsyncpa [#allocation3], 1
    %139 = vsyncpa [#allocation6], 1
    %140 = vsyncpa [#allocation4], 1

</llo_original>
